<compile_context>
chip_gen: v7x
topology: tpu7x:2x2x1
jax: 0.10.0
libtpu: 0.0.40
codegen_flags: <defaults>
</compile_context>

<pallas_src>
import jax
import jax.numpy as jnp
from jax import lax
from jax.experimental import pallas as pl
from jax.experimental.pallas import tpu as pltpu

BN_EPS = 1e-5
IN_FEATURES = 2048


# ----------------------------------------------------------------------------
# Pallas kernel: fully folded steering head  (out = f @ W_total + b_total)
# ----------------------------------------------------------------------------
def head_kernel(f_ref, w_ref, b_ref, o_ref):
    # f_ref: (TILE_B, 2048) f32 feature tile (pipelined from HBM)
    # w_ref: (1, 2048)      f32 collapsed weight row (lane-dense, grid-stationary)
    # b_ref: (1, 1)         f32 collapsed bias (SMEM scalar)
    # o_ref: (TILE_B, 1)    f32 output tile
    f = f_ref[...]
    w = w_ref[...]
    # N=1 output: elementwise mul (VPU) + cross-lane reduce (XLU) instead of a
    # nearly empty MXU matmul.  The kernel is HBM-bound on the feature read.
    out = jnp.sum(f * w, axis=-1, keepdims=True) + b_ref[0, 0]
    o_ref[...] = out


def _choose_tile_b(B):
    """Batch tile: full array for tiny B; otherwise aim for >=2 grid steps
    (so v7x's two TensorCores both get work) capped at 512 rows so the
    double-buffered f32 feature tiles stay ~8 MiB."""
    if B <= 8:
        return B
    half = -(-B // 2)                       # ceil(B / 2)
    return min(512, ((half + 7) // 8) * 8)


def head_forward(features, p):
    """features: (B, 2048) f32 -> (B, 1) f32, one fused Pallas call (batch-tiled)."""
    B = features.shape[0]

    # ---- fold eval-mode BatchNorm1d into the neighbouring Linear layers ------
    s2 = p["g2"] * lax.rsqrt(p["v2"] + BN_EPS)                 # (1, 512)
    w2f = p["w2"] * s2                                         # (1024, 512)
    b2f = (p["b2"] - p["m2"]) * s2 + p["be2"]                  # (1, 512)
    s4 = p["g4"] * lax.rsqrt(p["v4"] + BN_EPS)                 # (1, 128)
    w3f = p["w3"] * s4                                         # (512, 128)
    b3f = (p["b3"] - p["m4"]) * s4 + p["be4"]                  # (1, 128)

    # ---- collapse the activation-free head into one affine map (exact) ------
    # out = (((f@w1 + b1)@w2f + b2f)@w3f + b3f)@w4 + b4
    #     = f @ (w1@w2f@w3f@w4) + (b1@w2f@w3f@w4 + b2f@w3f@w4 + b3f@w4 + b4)
    v34 = w3f @ p["w4"]                                        # (512, 1)
    v234 = w2f @ v34                                           # (1024, 1)
    w_total = p["w1"] @ v234                                   # (2048, 1)
    b_total = p["b1"] @ v234 + b2f @ v34 + b3f @ p["w4"] + p["b4"]   # (1, 1)
    w_row = w_total.T                                          # (1, 2048) lane-dense

    TILE_B = _choose_tile_b(B)
    grid = (pl.cdiv(B, TILE_B),)                               # ragged last block OK

    out = pl.pallas_call(
        head_kernel,
        out_shape=jax.ShapeDtypeStruct((B, 1), jnp.float32),
        grid=grid,
        in_specs=[
            pl.BlockSpec((TILE_B, IN_FEATURES), lambda i: (i, 0)),   # features (pipelined, f32)
            pl.BlockSpec((1, IN_FEATURES), lambda i: (0, 0)),        # W_total row (resident, 8 KiB)
            pl.BlockSpec(memory_space=pltpu.MemorySpace.SMEM),       # b_total scalar
        ],
        out_specs=pl.BlockSpec((TILE_B, 1), lambda i: (i, 0)),
        compiler_params=pltpu.CompilerParams(
            dimension_semantics=("parallel",),
            vmem_limit_bytes=32 << 20,
        ),
    )(features, w_row, b_total)

    return out


def head_reference(f, p):
    """Pure-JAX staged reference of the head (eval-mode BN) for a sanity check."""
    x = f @ p["w1"] + p["b1"]
    x = x @ p["w2"] + p["b2"]
    x = (x - p["m2"]) * (p["g2"] / jnp.sqrt(p["v2"] + BN_EPS)) + p["be2"]
    x = x @ p["w3"] + p["b3"]
    x = (x - p["m4"]) * (p["g4"] / jnp.sqrt(p["v4"] + BN_EPS)) + p["be4"]
    return x @ p["w4"] + p["b4"]


# ----------------------------------------------------------------------------
# ResNet50 backbone (plain JAX glue; see TODO(synk) above)
# ----------------------------------------------------------------------------
def conv(x, w, stride, pad):
    return lax.conv_general_dilated(
        x, w, window_strides=(stride, stride),
        padding=((pad, pad), (pad, pad)),
        dimension_numbers=("NCHW", "OIHW", "NCHW"))


def bn2d(x):
    # BatchNorm2d in eval mode with init stats (gamma=1, beta=0, mean=0, var=1).
    return x * (1.0 / jnp.sqrt(1.0 + BN_EPS))


def maxpool_3x3_s2(x):
    return lax.reduce_window(
        x, -jnp.inf, lax.max,
        window_dimensions=(1, 1, 3, 3),
        window_strides=(1, 1, 2, 2),
        padding=((0, 0), (0, 0), (1, 1), (1, 1)))


def bottleneck(x, p):
    s = p["stride"]
    out = jax.nn.relu(bn2d(conv(x, p["w1"], 1, 0)))
    out = jax.nn.relu(bn2d(conv(out, p["w2"], s, 1)))
    out = bn2d(conv(out, p["w3"], 1, 0))
    identity = bn2d(conv(x, p["wd"], s, 0)) if p["wd"] is not None else x
    return jax.nn.relu(out + identity)


def resnet50_features(x, params):
    x = jax.nn.relu(bn2d(conv(x, params["conv1"], stride=2, pad=3)))
    x = maxpool_3x3_s2(x)
    for blocks in params["stages"]:
        for blk in blocks:
            x = bottleneck(x, blk)
    # adaptive avg pool to 1x1 + flatten -> (B, 2048)
    return jnp.mean(x, axis=(2, 3))


# ----------------------------------------------------------------------------
# Deterministic parameter construction
# ----------------------------------------------------------------------------
class ParamGen:
    def __init__(self, key):
        self.key = key
        self.i = 0

    def normal(self, shape, scale=0.05):
        k = jax.random.fold_in(self.key, self.i)
        self.i += 1
        return jax.random.normal(k, shape, dtype=jnp.float32) * scale


def make_backbone_params(key):
    pg = ParamGen(key)
    params = {"conv1": pg.normal((64, 3, 7, 7))}
    stages = []
    cin = 64
    for (n_blocks, width, cout, stride) in [(3, 64, 256, 1), (4, 128, 512, 2),
                                            (6, 256, 1024, 2), (3, 512, 2048, 2)]:
        blocks = []
        for b in range(n_blocks):
            s = stride if b == 0 else 1
            blk = {
                "w1": pg.normal((width, cin, 1, 1)),
                "w2": pg.normal((width, width, 3, 3)),
                "w3": pg.normal((cout, width, 1, 1)),
                "wd": pg.normal((cout, cin, 1, 1)) if b == 0 else None,
                "stride": s,
            }
            blocks.append(blk)
            cin = cout
        stages.append(blocks)
    params["stages"] = stages
    return params


def make_head_params(key):
    pg = ParamGen(key)

    def lin(cin, cout):
        return pg.normal((cin, cout), scale=0.02), pg.normal((1, cout), scale=0.02)

    def bn1d(n):
        # running_mean, running_var, gamma, beta  (PyTorch BatchNorm1d init)
        return (jnp.zeros((1, n), jnp.float32), jnp.ones((1, n), jnp.float32),
                jnp.ones((1, n), jnp.float32), jnp.zeros((1, n), jnp.float32))

    w1, b1 = lin(2048, 1024)
    w2, b2 = lin(1024, 512)
    w3, b3 = lin(512, 128)
    w4, b4 = lin(128, 1)
    m2, v2, g2, be2 = bn1d(512)
    m4, v4, g4, be4 = bn1d(128)
    return dict(w1=w1, b1=b1, w2=w2, b2=b2, m2=m2, v2=v2, g2=g2, be2=be2,
                w3=w3, b3=b3, m4=m4, v4=v4, g4=g4, be4=be4, w4=w4, b4=b4)


# ----------------------------------------------------------------------------
# Full Model_2 forward
# ----------------------------------------------------------------------------
def model2_forward(x1, backbone_params, head_params):
    feats = resnet50_features(x1, backbone_params)   # (B, 2048), mbnet_1 + flatten
    return head_forward(feats, head_params)          # (B, 1), fused Pallas head


if __name__ == "__main__":
    key = jax.random.PRNGKey(0)

    # small deterministic input: batch=2, RGB image 64x64 (NCHW, like PyTorch)
    x1 = jax.random.normal(jax.random.fold_in(key, 999), (2, 3, 64, 64), dtype=jnp.float32)

    backbone_params = make_backbone_params(jax.random.fold_in(key, 1))
    head_params = make_head_params(jax.random.fold_in(key, 2))

    fwd = jax.jit(lambda x: model2_forward(x, backbone_params, head_params))
    out = jax.block_until_ready(fwd(x1))

    assert out.shape == (2, 1), out.shape
    assert out.dtype == jnp.float32

    # numerical sanity check of the folded Pallas head vs. the staged head
    feats = jax.jit(lambda x: resnet50_features(x, backbone_params))(x1)
    ref = jax.block_until_ready(head_reference(feats, head_params))
    max_diff = float(jnp.max(jnp.abs(out - ref)))
    max_ref = float(jnp.max(jnp.abs(ref)))
    assert max_diff <= 1e-3 * (1.0 + max_ref), (max_diff, max_ref)

    print("KERNEL_OK")
</pallas_src>

<mosaic_0001>
module attributes {stable_mosaic.version = 11 : i64} {
  func.func @head_kernel(%arg0: i32, %arg1: memref<2x2048xf32, #tpu.memory_space<vmem>>, %arg2: memref<1x2048xf32, #tpu.memory_space<vmem>>, %arg3: memref<1x1xf32, #tpu.memory_space<smem>>, %arg4: memref<2x1xf32, #tpu.memory_space<vmem>>) attributes {dimension_semantics = [#tpu.dimension_semantics<parallel>], iteration_bounds = array<i64: 1>, scalar_prefetch = 0 : i64, scratch_operands = 0 : i64, tpu.core_type = #tpu.core_type<tc>, window_params = [{transform_indices = @transform_0, window_bounds = array<i64: 2, 2048>}, {pipeline_mode = #tpu.pipeline_mode<synchronous>, transform_indices = @transform_1, window_bounds = array<i64: 1, 2048>}, {transform_indices = @transform_2, window_bounds = array<i64: 1, 1>}, {transform_indices = @transform_3, window_bounds = array<i64: 2, 1>}]} {
    %c0 = arith.constant 0 : index
    %c0_0 = arith.constant 0 : index
    %0 = vector.load %arg1[%c0, %c0_0] : memref<2x2048xf32, #tpu.memory_space<vmem>>, vector<2x2048xf32>
    %c0_1 = arith.constant 0 : index
    %c0_2 = arith.constant 0 : index
    %1 = vector.load %arg2[%c0_1, %c0_2] : memref<1x2048xf32, #tpu.memory_space<vmem>>, vector<1x2048xf32>
    %2 = vector.broadcast %1 : vector<1x2048xf32> to vector<2x2048xf32>
    %3 = arith.mulf %0, %2 : vector<2x2048xf32>
    %cst = arith.constant dense<0.000000e+00> : vector<2xf32>
    %4 = vector.multi_reduction <add>, %3, %cst [1] : vector<2x2048xf32> to vector<2xf32>
    %5 = vector.shape_cast %4 : vector<2xf32> to vector<2x1xf32>
    %c0_3 = arith.constant 0 : index
    %c0_4 = arith.constant 0 : index
    %6 = memref.load %arg3[%c0_3, %c0_4] : memref<1x1xf32, #tpu.memory_space<smem>>
    %7 = vector.broadcast %6 : f32 to vector<2x1xf32>
    %8 = arith.addf %5, %7 : vector<2x1xf32>
    %c0_5 = arith.constant 0 : index
    %c0_6 = arith.constant 0 : index
    %9 = vector.load %arg4[%c0_5, %c0_6] : memref<2x1xf32, #tpu.memory_space<vmem>>, vector<2x1xf32>
    tpu.vector_store %arg4[%c0_5, %c0_6], %8 {strides = array<i32>} : memref<2x1xf32, #tpu.memory_space<vmem>>, vector<2x1xf32>,
    return
  }
  func.func @transform_0(%arg0: i32) -> (i32, i32) {
    %c0_i32 = arith.constant 0 : i32
    %c0_i32_0 = arith.constant 0 : i32
    return %arg0, %c0_i32 : i32, i32
  }
  func.func @transform_1(%arg0: i32) -> (i32, i32) {
    %c0_i32 = arith.constant 0 : i32
    %c0_i32_0 = arith.constant 0 : i32
    %c0_i32_1 = arith.constant 0 : i32
    return %c0_i32, %c0_i32_0 : i32, i32
  }
  func.func @transform_2(%arg0: i32) -> (i32, i32) {
    %c0_i32 = arith.constant 0 : i32
    %c0_i32_0 = arith.constant 0 : i32
    %c0_i32_1 = arith.constant 0 : i32
    return %c0_i32, %c0_i32_0 : i32, i32
  }
  func.func @transform_3(%arg0: i32) -> (i32, i32) {
    %c0_i32 = arith.constant 0 : i32
    %c0_i32_0 = arith.constant 0 : i32
    return %arg0, %c0_i32 : i32, i32
  }
}

</mosaic_0001>

<llo_original>
// kernel: _lambda_.1
$region0: #{_lambda_.1}
  #allocation0 [shape = 'u32[]', space=smem, size = 0x4, offset = 0x4, fixed_abs, tag = 'smem constant byte address 0x4 - core index']
  #allocation1 [shape = 'u32[144,128]{1,0:T(1,128)}', space=vmem, size = 0x12000, scoped, tag = 'internal scratch']
  #allocation2 [shape = 'f32[1,1]{1,0:T(1,128)S(6)}', space=smem, size = 0x200, scoped, tag = 'scoped memory for _lambda_.1']
  %s0 = inlined_call_operand.vmem [shape: f32[2,2048], index: 0, kind: input, shape index: {}]
  %s1 = inlined_call_operand.vmem [shape: f32[1,2048], index: 1, kind: input, shape index: {}]
  %s2 = inlined_call_operand.<no memory space> [shape: f32[1,1], index: 2, kind: input, shape index: {}]
  %s3 = inlined_call_operand.vmem [shape: f32[2,1], index: 3, kind: output, shape index: {}]
  %s4 = sld [smem:[#allocation0]]
  $region22: #{_lambda_.1} parent=0
    _
  %s6 = ssub.s32 1, %s4
  %s7 = scalar_select 0, %s6, %s4
  %8 = sst [smem:[#allocation2]] %s2
  // Predicated region
  $region2: #{_lambda_.1} parent=0 // pred_check
    _
  $region3: #{_lambda_.1} parent=0 // pred_check_branch
    %10 = sbr.rel (0) target = $region5
  $region4: #{_lambda_.1} parent=0 // pred_region
    _
  $region5: #{_lambda_.1} parent=0 // pred_fallthru
    _
  // Predicated region
  $region6: #{_lambda_.1} parent=0 // pred_check
    _
  $region7: #{_lambda_.1} parent=0 // pred_check_branch
    %12 = sbr.rel (0) target = $region9
  $region8: #{_lambda_.1} parent=0 // pred_region
    _
  $region9: #{_lambda_.1} parent=0 // pred_fallthru
    _
  // Predicated region
  $region10: #{_lambda_.1} parent=0 // pred_check
    _
  $region11: #{_lambda_.1} parent=0 // pred_check_branch
    %14 = sbr.rel (0) target = $region13
  $region12: #{_lambda_.1} parent=0 // pred_region
    _
  $region13: #{_lambda_.1} parent=0 // pred_fallthru
    _
  %v15 = vld [vmem:[%s0] sm:$0xff]
  %v16 = vld [vmem:[%s0 + $0x8] sm:$0xff]
  %v17 = vld [vmem:[%s0 + $0x10] sm:$0xff]
  %v18 = vld [vmem:[%s0 + $0x18] sm:$0xff]
  %v19 = vld [vmem:[%s1] sm:$0xff]
  %v20 = vld [vmem:[%s1 + $0x8] sm:$0xff]
  %v23 = vlaneseq
  %v24 = vshrl.u32 %v23, 7
  %v25 = vsub.s32 0, %v24
  %v26 = vrot.slane %v19, %v25
  %v27 = vlaneseq
  %v28 = vshrl.u32 %v27, 7
  %v29 = vsub.s32 1, %v28
  %v30 = vrot.slane %v19, %v29
  %v31 = vlaneseq
  %v32 = vshrl.u32 %v31, 7
  %v33 = vsub.s32 2, %v32
  %v34 = vrot.slane %v19, %v33
  %v35 = vlaneseq
  %v36 = vshrl.u32 %v35, 7
  %v37 = vsub.s32 3, %v36
  %v38 = vrot.slane %v19, %v37
  %v39 = vlaneseq
  %v40 = vshrl.u32 %v39, 7
  %v41 = vsub.s32 4, %v40
  %v42 = vrot.slane %v19, %v41
  %v43 = vlaneseq
  %v44 = vshrl.u32 %v43, 7
  %v45 = vsub.s32 5, %v44
  %v46 = vrot.slane %v19, %v45
  %v47 = vlaneseq
  %v48 = vshrl.u32 %v47, 7
  %v49 = vsub.s32 6, %v48
  %v50 = vrot.slane %v19, %v49
  %v51 = vlaneseq
  %v52 = vshrl.u32 %v51, 7
  %v53 = vsub.s32 7, %v52
  %v54 = vrot.slane %v19, %v53
  %v55 = vlaneseq
  %v56 = vshrl.u32 %v55, 7
  %v57 = vsub.s32 0, %v56
  %v58 = vrot.slane %v20, %v57
  %v59 = vlaneseq
  %v60 = vshrl.u32 %v59, 7
  %v61 = vsub.s32 1, %v60
  %v62 = vrot.slane %v20, %v61
  %v63 = vlaneseq
  %v64 = vshrl.u32 %v63, 7
  %v65 = vsub.s32 2, %v64
  %v66 = vrot.slane %v20, %v65
  %v67 = vlaneseq
  %v68 = vshrl.u32 %v67, 7
  %v69 = vsub.s32 3, %v68
  %v70 = vrot.slane %v20, %v69
  %v71 = vlaneseq
  %v72 = vshrl.u32 %v71, 7
  %v73 = vsub.s32 4, %v72
  %v74 = vrot.slane %v20, %v73
  %v75 = vlaneseq
  %v76 = vshrl.u32 %v75, 7
  %v77 = vsub.s32 5, %v76
  %v78 = vrot.slane %v20, %v77
  %v79 = vlaneseq
  %v80 = vshrl.u32 %v79, 7
  %v81 = vsub.s32 6, %v80
  %v82 = vrot.slane %v20, %v81
  %v83 = vlaneseq
  %v84 = vshrl.u32 %v83, 7
  %v85 = vsub.s32 7, %v84
  %v86 = vrot.slane %v20, %v85
  %v87 = vcombine.low %v26, %v30
  %v88 = vcombine.low %v34, %v38
  %v90 = vunpack.c.l.s4 1983009808
  %v91 = vunpack.c.0.s8 %v90
  %v92 = vlaneseq
  %v93 = vshrl.u32 %v92, 7
  %v94 = vsub.s32 %v91, %v93
  %v95 = vrot.slane %v87, %v94
  %v97 = vunpack.c.l.s4 1983009808
  %v98 = vunpack.c.0.s8 %v97
  %v99 = vlaneseq
  %v100 = vshrl.u32 %v99, 7
  %v101 = vsub.s32 %v98, %v100
  %v102 = vrot.slane %v88, %v101
  %v103 = vcombine.low %v95, %v102
  %v104 = vcombine.low %v42, %v46
  %v105 = vcombine.low %v50, %v54
  %v107 = vunpack.c.l.s4 1983009808
  %v108 = vunpack.c.0.s8 %v107
  %v109 = vlaneseq
  %v110 = vshrl.u32 %v109, 7
  %v111 = vsub.s32 %v108, %v110
  %v112 = vrot.slane %v104, %v111
  %v114 = vunpack.c.l.s4 1983009808
  %v115 = vunpack.c.0.s8 %v114
  %v116 = vlaneseq
  %v117 = vshrl.u32 %v116, 7
  %v118 = vsub.s32 %v115, %v117
  %v119 = vrot.slane %v105, %v118
  %v120 = vcombine.low %v112, %v119
  %v121 = vcombine.low %v58, %v62
  %v122 = vcombine.low %v66, %v70
  %v124 = vunpack.c.l.s4 1983009808
  %v125 = vunpack.c.0.s8 %v124
  %v126 = vlaneseq
  %v127 = vshrl.u32 %v126, 7
  %v128 = vsub.s32 %v125, %v127
  %v129 = vrot.slane %v121, %v128
  %v131 = vunpack.c.l.s4 1983009808
  %v132 = vunpack.c.0.s8 %v131
  %v133 = vlaneseq
  %v134 = vshrl.u32 %v133, 7
  %v135 = vsub.s32 %v132, %v134
  %v136 = vrot.slane %v122, %v135
  %v137 = vcombine.low %v129, %v136
  %v138 = vcombine.low %v74, %v78
  %v139 = vcombine.low %v82, %v86
  %v141 = vunpack.c.l.s4 1983009808
  %v142 = vunpack.c.0.s8 %v141
  %v143 = vlaneseq
  %v144 = vshrl.u32 %v143, 7
  %v145 = vsub.s32 %v142, %v144
  %v146 = vrot.slane %v138, %v145
  %v148 = vunpack.c.l.s4 1983009808
  %v149 = vunpack.c.0.s8 %v148
  %v150 = vlaneseq
  %v151 = vshrl.u32 %v150, 7
  %v152 = vsub.s32 %v149, %v151
  %v153 = vrot.slane %v139, %v152
  %v154 = vcombine.low %v146, %v153
  %v159 = vmul.f32 %v15, %v103
  %v160 = vmul.f32 %v16, %v120
  %v161 = vmul.f32 %v17, %v137
  %v162 = vmul.f32 %v18, %v154
  %v167 = vcombine.high %v159, %v159
  %v169 = vunpack.c.l.s4 1983009808
  %v170 = vunpack.c.0.s8 %v169
  %v171 = vlaneseq
  %v172 = vshrl.u32 %v171, 7
  %v173 = vsub.s32 %v170, %v172
  %v174 = vrot.slane %v159, %v173
  %v176 = vunpack.c.l.s4 1983009808
  %v177 = vunpack.c.0.s8 %v176
  %v178 = vlaneseq
  %v179 = vshrl.u32 %v178, 7
  %v180 = vsub.s32 %v177, %v179
  %v181 = vrot.slane %v167, %v180
  %v182 = vcombine.high %v174, %v174
  %v183 = vcombine.high %v181, %v181
  %v184 = vcombine.high %v160, %v160
  %v186 = vunpack.c.l.s4 1983009808
  %v187 = vunpack.c.0.s8 %v186
  %v188 = vlaneseq
  %v189 = vshrl.u32 %v188, 7
  %v190 = vsub.s32 %v187, %v189
  %v191 = vrot.slane %v160, %v190
  %v193 = vunpack.c.l.s4 1983009808
  %v194 = vunpack.c.0.s8 %v193
  %v195 = vlaneseq
  %v196 = vshrl.u32 %v195, 7
  %v197 = vsub.s32 %v194, %v196
  %v198 = vrot.slane %v184, %v197
  %v199 = vcombine.high %v191, %v191
  %v200 = vcombine.high %v198, %v198
  %v201 = vcombine.high %v161, %v161
  %v203 = vunpack.c.l.s4 1983009808
  %v204 = vunpack.c.0.s8 %v203
  %v205 = vlaneseq
  %v206 = vshrl.u32 %v205, 7
  %v207 = vsub.s32 %v204, %v206
  %v208 = vrot.slane %v161, %v207
  %v210 = vunpack.c.l.s4 1983009808
  %v211 = vunpack.c.0.s8 %v210
  %v212 = vlaneseq
  %v213 = vshrl.u32 %v212, 7
  %v214 = vsub.s32 %v211, %v213
  %v215 = vrot.slane %v201, %v214
  %v216 = vcombine.high %v208, %v208
  %v217 = vcombine.high %v215, %v215
  %v218 = vcombine.high %v162, %v162
  %v220 = vunpack.c.l.s4 1983009808
  %v221 = vunpack.c.0.s8 %v220
  %v222 = vlaneseq
  %v223 = vshrl.u32 %v222, 7
  %v224 = vsub.s32 %v221, %v223
  %v225 = vrot.slane %v162, %v224
  %v227 = vunpack.c.l.s4 1983009808
  %v228 = vunpack.c.0.s8 %v227
  %v229 = vlaneseq
  %v230 = vshrl.u32 %v229, 7
  %v231 = vsub.s32 %v228, %v230
  %v232 = vrot.slane %v218, %v231
  %v233 = vcombine.high %v225, %v225
  %v234 = vcombine.high %v232, %v232
  %vm251 = vcmask 1041408
  %v252 = vsel %vm251, %v174, 0.0
  %v253 = vsel %vm251, %v182, 0.0
  %v254 = vadd.f32 %v252, %v253
  %v255 = vsel %vm251, %v181, 0.0
  %v256 = vadd.f32 %v254, %v255
  %v257 = vsel %vm251, %v183, 0.0
  %v258 = vadd.f32 %v256, %v257
  %v259 = vsel %vm251, %v191, 0.0
  %v260 = vadd.f32 %v258, %v259
  %v261 = vsel %vm251, %v199, 0.0
  %v262 = vadd.f32 %v260, %v261
  %v263 = vsel %vm251, %v198, 0.0
  %v264 = vadd.f32 %v262, %v263
  %v265 = vsel %vm251, %v200, 0.0
  %v266 = vadd.f32 %v264, %v265
  %v267 = vsel %vm251, %v208, 0.0
  %v268 = vadd.f32 %v266, %v267
  %v269 = vsel %vm251, %v216, 0.0
  %v270 = vadd.f32 %v268, %v269
  %v271 = vsel %vm251, %v215, 0.0
  %v272 = vadd.f32 %v270, %v271
  %v273 = vsel %vm251, %v217, 0.0
  %v274 = vadd.f32 %v272, %v273
  %v275 = vsel %vm251, %v225, 0.0
  %v276 = vadd.f32 %v274, %v275
  %v277 = vsel %vm251, %v233, 0.0
  %v278 = vadd.f32 %v276, %v277
  %v279 = vsel %vm251, %v232, 0.0
  %v280 = vadd.f32 %v278, %v279
  %v281 = vsel %vm251, %v234, 0.0
  %v282 = vadd.f32 %v280, %v281
  %283 = vadd.xlane.f32.xlu0 %v282
  %v284 = vpop.xlane.xlu0 %283
  %s285 = sld [smem:[#allocation2]]
  %v286 = vstv %s285
  %v287 = vadd.f32 %v284, %v286
  %vm288 = vcmask 1024
  %289 = vst.msk [vmem:[%s3] sm:$0x3] %vm288, %v287
  // Predicated region
  $region14: #{_lambda_.1} parent=0 // pred_check
    _
  $region15: #{_lambda_.1} parent=0 // pred_check_branch
    %291 = sbr.rel (0) target = $region17
  $region16: #{_lambda_.1} parent=0 // pred_region
    _
  $region17: #{_lambda_.1} parent=0 // pred_fallthru
    _
  // Predicated region
  $region18: #{_lambda_.1} parent=0 // pred_check
    _
  $region19: #{_lambda_.1} parent=0 // pred_check_branch
    %293 = sbr.rel (0) target = $region21
  $region20: #{_lambda_.1} parent=0 // pred_region
    _
  $region21: #{_lambda_.1} parent=0 // pred_fallthru
    _

</llo_original>
